<compile_context>
chip_gen: v6e
topology: v6e:2x2x1
jax: 0.10.0
libtpu: 0.0.40
codegen_flags: <defaults>
</compile_context>

<pallas_src>
import jax
import jax.numpy as jnp
from jax import lax
from jax.experimental import pallas as pl
from jax.experimental.pallas import tpu as pltpu

V_THRESHOLD = 0.5  # BrainCog BaseNode default threshold


def hebb_kernel(x_ref, w_ref, s_ref, dw_ref):
    """Fused Hebb tile: drive matmul + spike threshold + Hebbian outer-product accumulate.

    Grid = (OUT tiles [parallel], B tiles [arbitrary / reduction, last]).
      x_ref  : [tb, IN]   input tile (batch rows x full feature axis)
      w_ref  : [to, IN]   weight tile in native nn.Linear layout
      s_ref  : [tb, to]   spike output tile
      dw_ref : [to, IN]   Hebbian update tile; same block across all B tiles, so it is
                          the VMEM-resident accumulator (no extra scratch needed).
    """
    b = pl.program_id(1)

    @pl.when(b == 0)
    def _init():
        dw_ref[...] = jnp.zeros_like(dw_ref)

    x = x_ref[...]                                    # [tb, IN]
    w = w_ref[...]                                    # [to, IN]

    # Drive: i = x @ W.T  (contract the shared IN axis; rhs-transposed matmul on the MXU,
    # f32 accumulation regardless of input dtype).
    i = lax.dot_general(
        x, w,
        dimension_numbers=(((1,), (1,)), ((), ())),
        preferred_element_type=jnp.float32,
    )                                                 # [tb, to]

    # IF node, single step: heaviside(i - v_th) with the surrogate (>= 0) convention.
    s = (i - V_THRESHOLD >= 0.0).astype(jnp.float32)
    s_ref[...] = s.astype(s_ref.dtype)

    # Hebbian update accumulated over batch tiles directly into the output block:
    # dw += s.T @ x  -> [to, IN].  (s is exactly {0,1}; casting to x's dtype is lossless.)
    dw_ref[...] += lax.dot_general(
        s.astype(x.dtype), x,
        dimension_numbers=(((0,), (0,)), ((), ())),
        preferred_element_type=jnp.float32,
    )


def _divisor_tiles(dim, align, cap):
    """Descending tile candidates that divide `dim`, are <= cap, and are multiples of
    `align` (the full dim is always a valid candidate when it fits the cap)."""
    cands = set()
    if dim <= cap:
        cands.add(dim)
    t = align
    while t <= min(dim, cap):
        if dim % t == 0:
            cands.add(t)
        t += align
    return sorted(cands, reverse=True) or [dim]


def hebb_forward(x, w, *, block_b=256, block_out=256, use_bf16=False,
                 s_dtype=jnp.float32, vmem_budget_bytes=48 << 20):
    """Returns (s, (dw,)) matching the PyTorch module's (spikes, dw-tuple) output.

    x: [B, IN] float32, w: [OUT, IN] float32 (torch.nn.Linear.weight layout).
    With use_bf16=True the streamed operands are rounded to bf16 once in the wrapper;
    spikes whose drive lands within ~1e-3 of V_THRESHOLD may flip vs. the f32 reference.
    """
    B, IN = x.shape
    OUT, IN_w = w.shape
    assert IN == IN_w

    if use_bf16:
        x = x.astype(jnp.bfloat16)
        w = w.astype(jnp.bfloat16)
    in_bytes = jnp.dtype(x.dtype).itemsize
    s_bytes = jnp.dtype(s_dtype).itemsize

    # --- Tile selection -------------------------------------------------------------
    # tb: multiple of 8 (sublane) or full B.  to: multiple of 128 (it is the lane axis
    # of the s output block) or full OUT.
    tb_cands = _divisor_tiles(B, 8, max(block_b, 8))
    to_cands = _divisor_tiles(OUT, 128, max(block_out, 128))
    ti, oi = 0, 0

    # Megacore (v7x, 2 TCs): make sure the "parallel" OUT axis has >= 2 tiles to shard.
    if OUT // to_cands[oi] < 2 and oi + 1 < len(to_cands):
        oi += 1

    def footprint(tb, to):
        # double-buffered x, w, s streams + resident (double-buffered) dw block
        return 2 * (tb * IN * in_bytes + to * IN * in_bytes
                    + tb * to * s_bytes + to * IN * 4)

    # Shrink tb first (never touches matmul N), then to, until the VMEM budget fits.
    while footprint(tb_cands[ti], to_cands[oi]) > vmem_budget_bytes:
        if ti + 1 < len(tb_cands):
            ti += 1
        elif oi + 1 < len(to_cands):
            oi += 1
        else:
            break
    tb, to = tb_cands[ti], to_cands[oi]

    assert B % tb == 0 and OUT % to == 0
    assert tb == B or tb % 8 == 0
    assert to == OUT or to % 128 == 0

    need = footprint(tb, to)
    vmem_limit = int(min(max(need + (4 << 20), 32 << 20), 64 << 20))

    grid = (OUT // to, B // tb)  # OUT tiles parallel, B (reduction) last.

    cost = pl.CostEstimate(
        flops=4 * B * IN * OUT,  # drive matmul + dw matmul
        transcendentals=0,
        bytes_accessed=(in_bytes * ((OUT // to) * B * IN + OUT * IN)  # x re-read + W
                        + s_bytes * B * OUT                           # s store
                        + 4 * OUT * IN),                              # dw store
    )

    s, dw = pl.pallas_call(
        hebb_kernel,
        out_shape=(
            jax.ShapeDtypeStruct((B, OUT), s_dtype),
            jax.ShapeDtypeStruct((OUT, IN), jnp.float32),
        ),
        grid_spec=pltpu.PrefetchScalarGridSpec(
            num_scalar_prefetch=0,
            grid=grid,
            in_specs=[
                pl.BlockSpec((tb, IN), lambda o, b: (b, 0)),   # x tile
                pl.BlockSpec((to, IN), lambda o, b: (o, 0)),   # W tile (native layout)
            ],
            out_specs=(
                pl.BlockSpec((tb, to), lambda o, b: (b, o)),   # s tile
                pl.BlockSpec((to, IN), lambda o, b: (o, 0)),   # dw tile (accumulator)
            ),
        ),
        compiler_params=pltpu.CompilerParams(
            dimension_semantics=("parallel", "arbitrary"),
            vmem_limit_bytes=vmem_limit,
        ),
        cost_estimate=cost,
    )(x, w)
    return s, (dw,)


def hebb_reference(x, w):
    i = x @ w.T
    s = (i - V_THRESHOLD >= 0.0).astype(jnp.float32)
    dw = s.T @ x
    return s, (dw,)


if __name__ == "__main__":
    # Small, tile-aligned shapes that still exercise a real (2, 2) grid with the
    # default tile sizes: OUT split into two parallel 128-wide tiles (so both v7x
    # TensorCores get work) and B reduced over two 256-row tiles (exercising the
    # resident-dw accumulation path).
    B, IN, OUT = 512, 128, 256

    key = jax.random.PRNGKey(0)
    kx, kw = jax.random.split(key)

    # Input activations.
    x = jax.random.uniform(kx, (B, IN), dtype=jnp.float32)

    # Deterministic nn.Linear-style init: U(-1/sqrt(IN), 1/sqrt(IN)), bias=False.
    bound = 1.0 / (IN ** 0.5)
    w = jax.random.uniform(kw, (OUT, IN), dtype=jnp.float32,
                           minval=-bound, maxval=bound)

    s, (dw,) = hebb_forward(x, w)
    s = jax.block_until_ready(s)
    dw = jax.block_until_ready(dw)

    s_ref, (dw_ref,) = hebb_reference(x, w)
    assert s.shape == (B, OUT) and dw.shape == (OUT, IN)
    assert jnp.allclose(s, s_ref, atol=1e-5)
    assert jnp.allclose(dw, dw_ref, atol=1e-4)

    print("KERNEL_OK")
</pallas_src>

<mosaic_0001>
module attributes {stable_mosaic.version = 11 : i64} {
  func.func @hebb_kernel(%arg0: i32, %arg1: i32, %arg2: memref<256x128xf32, #tpu.memory_space<vmem>>, %arg3: memref<128x128xf32, #tpu.memory_space<vmem>>, %arg4: memref<256x128xf32, #tpu.memory_space<vmem>>, %arg5: memref<128x128xf32, #tpu.memory_space<vmem>>) attributes {dimension_semantics = [#tpu.dimension_semantics<parallel>, #tpu.dimension_semantics<arbitrary>], iteration_bounds = array<i64: 2, 2>, scalar_prefetch = 0 : i64, scratch_operands = 0 : i64, tpu.core_type = #tpu.core_type<tc>, window_params = [{transform_indices = @transform_0, window_bounds = array<i64: 256, 128>}, {transform_indices = @transform_1, window_bounds = array<i64: 128, 128>}, {transform_indices = @transform_2, window_bounds = array<i64: 256, 128>}, {transform_indices = @transform_3, window_bounds = array<i64: 128, 128>}]} {
    %c0_i32 = arith.constant 0 : i32
    %0 = arith.cmpi eq, %arg1, %c0_i32 : i32
    %1 = arith.extui %0 : i1 to i32
    %c0_i32_0 = arith.constant 0 : i32
    %2 = arith.cmpi ne, %1, %c0_i32_0 : i32
    scf.if %2 {
      %cst_13 = arith.constant 0.000000e+00 : f32
      %17 = vector.broadcast %cst_13 : f32 to vector<128x128xf32>
      %c0_14 = arith.constant 0 : index
      %c0_15 = arith.constant 0 : index
      %18 = vector.load %arg5[%c0_14, %c0_15] : memref<128x128xf32, #tpu.memory_space<vmem>>, vector<128x128xf32>
      tpu.vector_store %arg5[%c0_14, %c0_15], %17 {strides = array<i32>} : memref<128x128xf32, #tpu.memory_space<vmem>>, vector<128x128xf32>,
    } else {
    }
    %c0 = arith.constant 0 : index
    %c0_1 = arith.constant 0 : index
    %3 = vector.load %arg2[%c0, %c0_1] : memref<256x128xf32, #tpu.memory_space<vmem>>, vector<256x128xf32>
    %c0_2 = arith.constant 0 : index
    %c0_3 = arith.constant 0 : index
    %4 = vector.load %arg3[%c0_2, %c0_3] : memref<128x128xf32, #tpu.memory_space<vmem>>, vector<128x128xf32>
    %cst = arith.constant dense<0.000000e+00> : vector<256x128xf32>
    %5 = tpu.matmul %3, %4, %cst {dimension_numbers = #tpu.dot_dimension_numbers<[1], [1], [0], [0], [0, 0, 1, 0], [], []>} : vector<256x128xf32>, vector<128x128xf32>, vector<256x128xf32> -> vector<256x128xf32>
    %cst_4 = arith.constant 5.000000e-01 : f32
    %6 = vector.broadcast %cst_4 : f32 to vector<256x128xf32>
    %7 = arith.subf %5, %6 : vector<256x128xf32>
    %cst_5 = arith.constant 0.000000e+00 : f32
    %8 = vector.broadcast %cst_5 : f32 to vector<256x128xf32>
    %9 = arith.cmpf oge, %7, %8 : vector<256x128xf32>
    %10 = arith.extui %9 : vector<256x128xi1> to vector<256x128xi32>
    %11 = arith.sitofp %10 : vector<256x128xi32> to vector<256x128xf32>
    %c0_6 = arith.constant 0 : index
    %c0_7 = arith.constant 0 : index
    %12 = vector.load %arg4[%c0_6, %c0_7] : memref<256x128xf32, #tpu.memory_space<vmem>>, vector<256x128xf32>
    tpu.vector_store %arg4[%c0_6, %c0_7], %11 {strides = array<i32>} : memref<256x128xf32, #tpu.memory_space<vmem>>, vector<256x128xf32>,
    %c0_8 = arith.constant 0 : index
    %c0_9 = arith.constant 0 : index
    %13 = vector.load %arg5[%c0_8, %c0_9] : memref<128x128xf32, #tpu.memory_space<vmem>>, vector<128x128xf32>
    %cst_10 = arith.constant dense<0.000000e+00> : vector<128x128xf32>
    %14 = tpu.matmul %11, %3, %cst_10 {dimension_numbers = #tpu.dot_dimension_numbers<[0], [0], [1], [1], [0, 1, 1, 1], [], []>} : vector<256x128xf32>, vector<256x128xf32>, vector<128x128xf32> -> vector<128x128xf32>
    %15 = arith.addf %13, %14 : vector<128x128xf32>
    %c0_11 = arith.constant 0 : index
    %c0_12 = arith.constant 0 : index
    %16 = vector.load %arg5[%c0_11, %c0_12] : memref<128x128xf32, #tpu.memory_space<vmem>>, vector<128x128xf32>
    tpu.vector_store %arg5[%c0_11, %c0_12], %15 {strides = array<i32>} : memref<128x128xf32, #tpu.memory_space<vmem>>, vector<128x128xf32>,
    return
  }
  func.func @transform_0(%arg0: i32, %arg1: i32) -> (i32, i32) {
    %c0_i32 = arith.constant 0 : i32
    %c0_i32_0 = arith.constant 0 : i32
    return %arg1, %c0_i32 : i32, i32
  }
  func.func @transform_1(%arg0: i32, %arg1: i32) -> (i32, i32) {
    %c0_i32 = arith.constant 0 : i32
    %c0_i32_0 = arith.constant 0 : i32
    return %arg0, %c0_i32 : i32, i32
  }
  func.func @transform_2(%arg0: i32, %arg1: i32) -> (i32, i32) {
    %c0_i32 = arith.constant 0 : i32
    return %arg1, %arg0 : i32, i32
  }
  func.func @transform_3(%arg0: i32, %arg1: i32) -> (i32, i32) {
    %c0_i32 = arith.constant 0 : i32
    %c0_i32_0 = arith.constant 0 : i32
    return %arg0, %c0_i32 : i32, i32
  }
}

</mosaic_0001>

<llo_original>
// kernel: tpu_custom_call.1
$region0: #{tpu_custom_call.1}
  #allocation0 [shape = 'u32[]', space=smem, size = 0x4, offset = 0x4, fixed_abs, tag = 'smem constant byte address 0x4 - core index']
  #allocation1 [shape = 'u32[144,128]{1,0:T(1,128)}', space=vmem, size = 0x12000, scoped, tag = 'internal scratch']
  %s0 = inlined_call_operand.hbm [shape: f32[512,128], index: 0, kind: input, shape index: {}]
  %s1 = inlined_call_operand.hbm [shape: f32[256,128], index: 1, kind: input, shape index: {}]
  %s2 = inlined_call_operand.hbm [shape: f32[512,256], index: 2, kind: output, shape index: {0}]
  %s3 = inlined_call_operand.hbm [shape: f32[256,128], index: 3, kind: output, shape index: {1}]
  %4 = xla_tuple %s2, %s3
  %s5 = sld [smem:[#allocation0]]
  $region61: #{tpu_custom_call.1} parent=0
    _
  %s7 = ssub.s32 1, %s5
  %s8 = scalar_select 0, %s7, %s5
  $region1: #{tpu_custom_call.1} parent=0
    #allocation2 [shape = 'u8[262144]{0}', space=vmem, size = 0x40000, scoped, tag = 'input window, operand 0']
    #allocation3 [shape = 's32[2]{0}', space=sflag, size = 0x8, scoped, tag = 'scoped memory for tpu_custom_call.1']
    #allocation4 [shape = 's32[2]{0}', space=sflag, size = 0x8, scoped, tag = 'scoped memory for tpu_custom_call.1']
    #allocation5 [shape = 'u8[131072]{0}', space=vmem, size = 0x20000, scoped, tag = 'input window, operand 1']
    #allocation6 [shape = 's32[2]{0}', space=sflag, size = 0x8, scoped, tag = 'scoped memory for tpu_custom_call.1']
    #allocation7 [shape = 'u8[262144]{0}', space=vmem, size = 0x40000, scoped, tag = 'output window, operand 0']
    #allocation8 [shape = 'u8[131072]{0}', space=vmem, size = 0x20000, scoped, tag = 'output window, operand 1']
    #allocation9 [shape = 's32[2]{0}', space=sflag, size = 0x8, scoped, tag = 'scoped memory for tpu_custom_call.1']
    %9 = vsyncpa [#allocation3], 0
    %s10 = scalar_lea.sflag [#allocation3], 1
    %11 = vsyncpa %s10, 0
    %12 = vsyncpa [#allocation6], 0
    %s13 = scalar_lea.sflag [#allocation6], 1
    %14 = vsyncpa %s13, 0
    %15 = vsyncpa [#allocation4], 0
    %s16 = scalar_lea.sflag [#allocation4], 1
    %17 = vsyncpa %s16, 0
    %18 = vsyncpa [#allocation9], 0
    %s19 = scalar_lea.sflag [#allocation9], 1
    %20 = vsyncpa %s19, 0
    loop: start=0, step=1, limit=6
    $region2: #{tpu_custom_call.1} parent=1 // loop_pre_header
      _
    $region3: #{tpu_custom_call.1} parent=1 // loop_header
      %s22 = sphi 0, %s26
      %p23 = scmp.ge.s32.totalorder %s22, 6
      %s29 = sphi 0, %s41
      %s30 = sphi 0, %s37
      %s31 = sphi 0, %s29
      %s32 = sphi 0, %s30
      %s33 = sphi 0, %s31
      %s34 = sphi 0, %s32
      %s44 = sphi 0, %s46
      %s47 = sphi 0, %s44
      %s48 = sphi 0, %s47
      %s64 = sphi 0, %s48
      %s70 = sphi 0, %s72
      %s73 = sphi 0, %s70
      %s74 = sphi 0, %s73
      %s90 = sphi 0, %s74
      %s98 = sphi 0, %s100
      %s101 = sphi 0, %s98
      %s102 = sphi 0, %s101
      %s118 = sphi 0, %s102
      %s124 = sphi 0, %s126
      %s127 = sphi 0, %s124
      %s128 = sphi 0, %s127
      %s144 = sphi 0, %s128
    $region4: #{tpu_custom_call.1} parent=1 // loop_header_branch
      %25 = sbr.rel (%p23) target = $region8
    $region5: #{tpu_custom_call.1} parent=1 // loop_body
      %s27 = ssub.s32 %s22, 1
      %s28 = ssub.s32 %s22, 2
      %s35 = sadd.s32 1, %s30
      %p36 = scmp.ge.s32.totalorder %s35, 2
      %s37 = scalar_select %p36, 0, %s35
      %s38 = sadd.s32 1, %s29
      %s39 = scalar_select %p36, %s38, %s29
      %p40 = scmp.ge.s32.totalorder %s39, 2
      %s41 = scalar_select %p40, 0, %s39
      %s42 = ssub.s32 %s30, %s37
      %p43 = scmp.eq.s32.totalorder %s42, 0
      %s45 = sadd.s32 %s44, 1
      %s46 = scalar_select %p43, %s44, %s45
      %p49 = pneg %p43
      %p50 = scmp.eq.s32.totalorder %s22, 3
      %p51 = por %p49, %p50
      %p52 = scmp.ne.s32.totalorder %s44, %s47
      %p53 = scmp.eq.s32.totalorder %s22, 0
      %p54 = por %p52, %p53
      %p55 = scmp.ne.s32.totalorder %s44, %s47
      %p56 = scmp.eq.s32.totalorder %s27, 3
      %p57 = por %p55, %p56
      %p58 = scmp.ne.s32.totalorder %s47, %s48
      %p59 = scmp.eq.s32.totalorder %s27, 0
      %p60 = por %p58, %p59
      %p61 = scmp.ne.s32.totalorder %s47, %s48
      %p62 = scmp.eq.s32.totalorder %s28, 3
      %p63 = por %p61, %p62
      %p65 = scmp.ne.s32.totalorder %s48, %s64
      %p66 = scmp.eq.s32.totalorder %s28, 0
      %p67 = por %p65, %p66
      %s68 = ssub.s32 %s29, %s41
      %p69 = scmp.eq.s32.totalorder %s68, 0
      %s71 = sadd.s32 %s70, 1
      %s72 = scalar_select %p69, %s70, %s71
      %p75 = pneg %p69
      %p76 = scmp.eq.s32.totalorder %s22, 3
      %p77 = por %p75, %p76
      %p78 = scmp.ne.s32.totalorder %s70, %s73
      %p79 = scmp.eq.s32.totalorder %s22, 0
      %p80 = por %p78, %p79
      %p81 = scmp.ne.s32.totalorder %s70, %s73
      %p82 = scmp.eq.s32.totalorder %s27, 3
      %p83 = por %p81, %p82
      %p84 = scmp.ne.s32.totalorder %s73, %s74
      %p85 = scmp.eq.s32.totalorder %s27, 0
      %p86 = por %p84, %p85
      %p87 = scmp.ne.s32.totalorder %s73, %s74
      %p88 = scmp.eq.s32.totalorder %s28, 3
      %p89 = por %p87, %p88
      %p91 = scmp.ne.s32.totalorder %s74, %s90
      %p92 = scmp.eq.s32.totalorder %s28, 0
      %p93 = por %p91, %p92
      %s94 = ssub.s32 %s30, %s37
      %s95 = ssub.s32 %s29, %s41
      %s96 = sor.u32 %s94, %s95
      %p97 = scmp.eq.s32.totalorder %s96, 0
      %s99 = sadd.s32 %s98, 1
      %s100 = scalar_select %p97, %s98, %s99
      %p103 = pneg %p97
      %p104 = scmp.eq.s32.totalorder %s22, 3
      %p105 = por %p103, %p104
      %p106 = scmp.ne.s32.totalorder %s98, %s101
      %p107 = scmp.eq.s32.totalorder %s22, 0
      %p108 = por %p106, %p107
      %p109 = scmp.ne.s32.totalorder %s98, %s101
      %p110 = scmp.eq.s32.totalorder %s27, 3
      %p111 = por %p109, %p110
      %p112 = scmp.ne.s32.totalorder %s101, %s102
      %p113 = scmp.eq.s32.totalorder %s27, 0
      %p114 = por %p112, %p113
      %p115 = scmp.ne.s32.totalorder %s101, %s102
      %p116 = scmp.eq.s32.totalorder %s28, 3
      %p117 = por %p115, %p116
      %p119 = scmp.ne.s32.totalorder %s102, %s118
      %p120 = scmp.eq.s32.totalorder %s28, 0
      %p121 = por %p119, %p120
      %s122 = ssub.s32 %s29, %s41
      %p123 = scmp.eq.s32.totalorder %s122, 0
      %s125 = sadd.s32 %s124, 1
      %s126 = scalar_select %p123, %s124, %s125
      %p129 = pneg %p123
      %p130 = scmp.eq.s32.totalorder %s22, 3
      %p131 = por %p129, %p130
      %p132 = scmp.ne.s32.totalorder %s124, %s127
      %p133 = scmp.eq.s32.totalorder %s22, 0
      %p134 = por %p132, %p133
      %p135 = scmp.ne.s32.totalorder %s124, %s127
      %p136 = scmp.eq.s32.totalorder %s27, 3
      %p137 = por %p135, %p136
      %p138 = scmp.ne.s32.totalorder %s127, %s128
      %p139 = scmp.eq.s32.totalorder %s27, 0
      %p140 = por %p138, %p139
      %p141 = scmp.ne.s32.totalorder %s127, %s128
      %p142 = scmp.eq.s32.totalorder %s28, 3
      %p143 = por %p141, %p142
      %p145 = scmp.ne.s32.totalorder %s128, %s144
      %p146 = scmp.eq.s32.totalorder %s28, 0
      %p147 = por %p145, %p146
      %p148 = scmp.le.s32.totalorder 1, %s22
      %p149 = scmp.lt.s32.totalorder %s22, 5
      %p150 = pnand %p148, %p149
      %p151 = pneg %p150
      // Predicated region
      $region9: #{tpu_custom_call.1} parent=5 // pred_check
        _
      $region10: #{tpu_custom_call.1} parent=5 // pred_check_branch
        %153 = sbr.rel (%p150) target = $region12
      $region11: #{tpu_custom_call.1} parent=5 // pred_region
        %s154 = ssub.s32 %s22, 1
      $region12: #{tpu_custom_call.1} parent=5 // pred_fallthru
        _
      %p155 = scmp.lt.s32.totalorder %s22, 4
      // Predicated region
      $region13: #{tpu_custom_call.1} parent=5 // pred_check
        %p156 = pneg %p155
      $region14: #{tpu_custom_call.1} parent=5 // pred_check_branch
        %158 = sbr.rel (%p156) target = $region16
      $region15: #{tpu_custom_call.1} parent=5 // pred_region
        // Predicated region
        $region17: #{tpu_custom_call.1} parent=15 // pred_check
          %p159 = pneg %p54
        $region18: #{tpu_custom_call.1} parent=15 // pred_check_branch
          %161 = sbr.rel (%p159) target = $region20
        $region19: #{tpu_custom_call.1} parent=15 // pred_region
          %s162 = sand.u32 %s44, 1
          %s163 = scalar_lea.sflag [#allocation3], %s162
          %s164 = sand.u32 %s44, 1
          %s165 = smul.addr %s164, 256
          %s166 = scalar_lea.vmem [#allocation2], %s165
          %s167 = smul.u32 32, %s30
          %s169 = ssub.s32 4096, 4096
          %170 = vsyncadd %s163, %s169
          %s171 = smul.addr %s167, 128
          %s172 = scalar_lea.hbm %s0, %s171
          %s173 = sshll.u32 %s166, 4
          %s174 = int_to_ptr.vmem [resolvable:$true] %s173
          %179 = dma.hbm_to_vmem [thread:$0]  %s172, 4096, %s174, %s163, 128, 128, 8
        $region20: #{tpu_custom_call.1} parent=15 // pred_fallthru
          _
        // Predicated region
        $region21: #{tpu_custom_call.1} parent=15 // pred_check
          %p180 = pneg %p80
        $region22: #{tpu_custom_call.1} parent=15 // pred_check_branch
          %182 = sbr.rel (%p180) target = $region24
        $region23: #{tpu_custom_call.1} parent=15 // pred_region
          %s183 = sand.u32 %s70, 1
          %s184 = scalar_lea.sflag [#allocation6], %s183
          %s185 = sand.u32 %s70, 1
          %s186 = smul.addr %s185, 128
          %s187 = scalar_lea.vmem [#allocation5], %s186
          %s188 = smul.u32 16, %s29
          %s190 = ssub.s32 2048, 2048
          %191 = vsyncadd %s184, %s190
          %s192 = smul.addr %s188, 128
          %s193 = scalar_lea.hbm %s1, %s192
          %s194 = sshll.u32 %s187, 4
          %s195 = int_to_ptr.vmem [resolvable:$true] %s194
          %200 = dma.hbm_to_vmem [thread:$0]  %s193, 2048, %s195, %s184, 128, 128, 8
        $region24: #{tpu_custom_call.1} parent=15 // pred_fallthru
          _
      $region16: #{tpu_custom_call.1} parent=5 // pred_fallthru
        _
      %p201 = scmp.le.s32.totalorder 1, %s22
      %p202 = scmp.lt.s32.totalorder %s22, 5
      %p203 = pnand %p201, %p202
      %p204 = pneg %p203
      // Predicated region
      $region25: #{tpu_custom_call.1} parent=5 // pred_check
        _
      $region26: #{tpu_custom_call.1} parent=5 // pred_check_branch
        %206 = sbr.rel (%p203) target = $region28
      $region27: #{tpu_custom_call.1} parent=5 // pred_region
        %s207 = ssub.s32 %s22, 1
        %s208 = sand.u32 %s47, 1
        %s209 = scalar_lea.sflag [#allocation3], %s208
        %s210 = sand.u32 %s47, 1
        %s211 = smul.addr %s210, 256
        %s212 = scalar_lea.vmem [#allocation2], %s211
        // Predicated region
        $region29: #{tpu_custom_call.1} parent=27 // pred_check
          %p213 = pneg %p60
        $region30: #{tpu_custom_call.1} parent=27 // pred_check_branch
          %215 = sbr.rel (%p213) target = $region32
        $region31: #{tpu_custom_call.1} parent=27 // pred_region
          %216 = dma.done %s209, 4096
        $region32: #{tpu_custom_call.1} parent=27 // pred_fallthru
          _
        %s217 = sand.u32 %s73, 1
        %s218 = scalar_lea.sflag [#allocation6], %s217
        %s219 = sand.u32 %s73, 1
        %s220 = smul.addr %s219, 128
        %s221 = scalar_lea.vmem [#allocation5], %s220
        // Predicated region
        $region33: #{tpu_custom_call.1} parent=27 // pred_check
          %p222 = pneg %p86
        $region34: #{tpu_custom_call.1} parent=27 // pred_check_branch
          %224 = sbr.rel (%p222) target = $region36
        $region35: #{tpu_custom_call.1} parent=27 // pred_region
          %225 = dma.done %s218, 2048
        $region36: #{tpu_custom_call.1} parent=27 // pred_fallthru
          _
        %s226 = sand.u32 %s47, 1
        %s227 = scalar_lea.sflag [#allocation3], %s226
        %s228 = sand.u32 %s47, 1
        %s229 = smul.addr %s228, 256
        %s230 = scalar_lea.vmem [#allocation2], %s229
        %p231 = pneg %p60
        %p232 = pneg %p57
        %s233 = sand.u32 %s73, 1
        %s234 = scalar_lea.sflag [#allocation6], %s233
        %s235 = sand.u32 %s73, 1
        %s236 = smul.addr %s235, 128
        %s237 = scalar_lea.vmem [#allocation5], %s236
        %p238 = pneg %p86
        %p239 = pneg %p83
        %p240 = pneg %p114
        %p241 = pneg %p111
        %s242 = sand.u32 %s101, 1
        %s243 = scalar_lea.sflag [#allocation4], %s242
        %s244 = sand.u32 %s101, 1
        %s245 = smul.addr %s244, 256
        %s246 = scalar_lea.vmem [#allocation7], %s245
        %p247 = pneg %p140
        %p248 = pneg %p137
        %s249 = sand.u32 %s127, 1
        %s250 = scalar_lea.sflag [#allocation9], %s249
        %s251 = sand.u32 %s127, 1
        %s252 = smul.addr %s251, 128
        %s253 = scalar_lea.vmem [#allocation8], %s252
        %s254 = smul.u32 32, %s32
        %s255 = smul.u32 16, %s31
        %s256 = smul.u32 32, %s32
        %s257 = smul.u32 16, %s31
        %p258 = scmp.eq.s32.totalorder %s32, 0
        // Predicated region
        $region37: #{tpu_custom_call.1} parent=27 // pred_check
          %p259 = pneg %p258
        $region38: #{tpu_custom_call.1} parent=27 // pred_check_branch
          %261 = sbr.rel (%p259) target = $region40
        $region39: #{tpu_custom_call.1} parent=27 // pred_region
          %262 = vst [vmem:[%s253] sm:$0xff] 0.0
          %263 = vst [vmem:[%s253 + $0x8] sm:$0xff] 0.0
          %264 = vst [vmem:[%s253 + $0x10] sm:$0xff] 0.0
          %265 = vst [vmem:[%s253 + $0x18] sm:$0xff] 0.0
          %266 = vst [vmem:[%s253 + $0x20] sm:$0xff] 0.0
          %267 = vst [vmem:[%s253 + $0x28] sm:$0xff] 0.0
          %268 = vst [vmem:[%s253 + $0x30] sm:$0xff] 0.0
          %269 = vst [vmem:[%s253 + $0x38] sm:$0xff] 0.0
          %270 = vst [vmem:[%s253 + $0x40] sm:$0xff] 0.0
          %271 = vst [vmem:[%s253 + $0x48] sm:$0xff] 0.0
          %272 = vst [vmem:[%s253 + $0x50] sm:$0xff] 0.0
          %273 = vst [vmem:[%s253 + $0x58] sm:$0xff] 0.0
          %274 = vst [vmem:[%s253 + $0x60] sm:$0xff] 0.0
          %275 = vst [vmem:[%s253 + $0x68] sm:$0xff] 0.0
          %276 = vst [vmem:[%s253 + $0x70] sm:$0xff] 0.0
          %277 = vst [vmem:[%s253 + $0x78] sm:$0xff] 0.0
        $region40: #{tpu_custom_call.1} parent=27 // pred_fallthru
          _
        %v278 = vld [vmem:[%s212] sm:$0xff]
        %v279 = vld [vmem:[%s212 + $0x8] sm:$0xff]
        %v280 = vld [vmem:[%s212 + $0x10] sm:$0xff]
        %v281 = vld [vmem:[%s212 + $0x18] sm:$0xff]
        %v282 = vld [vmem:[%s212 + $0x20] sm:$0xff]
        %v283 = vld [vmem:[%s212 + $0x28] sm:$0xff]
        %v284 = vld [vmem:[%s212 + $0x30] sm:$0xff]
        %v285 = vld [vmem:[%s212 + $0x38] sm:$0xff]
        %v286 = vld [vmem:[%s212 + $0x40] sm:$0xff]
        %v287 = vld [vmem:[%s212 + $0x48] sm:$0xff]
        %v288 = vld [vmem:[%s212 + $0x50] sm:$0xff]
        %v289 = vld [vmem:[%s212 + $0x58] sm:$0xff]
        %v290 = vld [vmem:[%s212 + $0x60] sm:$0xff]
        %v291 = vld [vmem:[%s212 + $0x68] sm:$0xff]
        %v292 = vld [vmem:[%s212 + $0x70] sm:$0xff]
        %v293 = vld [vmem:[%s212 + $0x78] sm:$0xff]
        %v294 = vld [vmem:[%s212 + $0x80] sm:$0xff]
        %v295 = vld [vmem:[%s212 + $0x88] sm:$0xff]
        %v296 = vld [vmem:[%s212 + $0x90] sm:$0xff]
        %v297 = vld [vmem:[%s212 + $0x98] sm:$0xff]
        %v298 = vld [vmem:[%s212 + $0xa0] sm:$0xff]
        %v299 = vld [vmem:[%s212 + $0xa8] sm:$0xff]
        %v300 = vld [vmem:[%s212 + $0xb0] sm:$0xff]
        %v301 = vld [vmem:[%s212 + $0xb8] sm:$0xff]
        %v302 = vld [vmem:[%s212 + $0xc0] sm:$0xff]
        %v303 = vld [vmem:[%s212 + $0xc8] sm:$0xff]
        %v304 = vld [vmem:[%s212 + $0xd0] sm:$0xff]
        %v305 = vld [vmem:[%s212 + $0xd8] sm:$0xff]
        %v306 = vld [vmem:[%s212 + $0xe0] sm:$0xff]
        %v307 = vld [vmem:[%s212 + $0xe8] sm:$0xff]
        %v308 = vld [vmem:[%s212 + $0xf0] sm:$0xff]
        %v309 = vld [vmem:[%s212 + $0xf8] sm:$0xff]
        %v310 = vld [vmem:[%s221] sm:$0xff]
        %v311 = vld [vmem:[%s221 + $0x8] sm:$0xff]
        %v312 = vld [vmem:[%s221 + $0x10] sm:$0xff]
        %v313 = vld [vmem:[%s221 + $0x18] sm:$0xff]
        %v314 = vld [vmem:[%s221 + $0x20] sm:$0xff]
        %v315 = vld [vmem:[%s221 + $0x28] sm:$0xff]
        %v316 = vld [vmem:[%s221 + $0x30] sm:$0xff]
        %v317 = vld [vmem:[%s221 + $0x38] sm:$0xff]
        %v318 = vld [vmem:[%s221 + $0x40] sm:$0xff]
        %v319 = vld [vmem:[%s221 + $0x48] sm:$0xff]
        %v320 = vld [vmem:[%s221 + $0x50] sm:$0xff]
        %v321 = vld [vmem:[%s221 + $0x58] sm:$0xff]
        %v322 = vld [vmem:[%s221 + $0x60] sm:$0xff]
        %v323 = vld [vmem:[%s221 + $0x68] sm:$0xff]
        %v324 = vld [vmem:[%s221 + $0x70] sm:$0xff]
        %v325 = vld [vmem:[%s221 + $0x78] sm:$0xff]
        %326 = vmatprep.subr.mxu0 0.0
        %327 = vmatpush1.xpose.msra.mxu0 %v325
        %328 = vmatprep.subr.mxu0 0.0
        %329 = vmatpush1.xpose.msra.mxu0 %v324
        %330 = vmatprep.subr.mxu0 0.0
        %331 = vmatpush1.xpose.msra.mxu0 %v323
        %332 = vmatprep.subr.mxu0 0.0
        %333 = vmatpush1.xpose.msra.mxu0 %v322
        %334 = vmatprep.subr.mxu0 0.0
        %335 = vmatpush1.xpose.msra.mxu0 %v321
        %336 = vmatprep.subr.mxu0 0.0
        %337 = vmatpush1.xpose.msra.mxu0 %v320
        %338 = vmatprep.subr.mxu0 0.0
        %339 = vmatpush1.xpose.msra.mxu0 %v319
        %340 = vmatprep.subr.mxu0 0.0
        %341 = vmatpush1.xpose.msra.mxu0 %v318
        %342 = vmatprep.subr.mxu0 0.0
        %343 = vmatpush1.xpose.msra.mxu0 %v317
        %344 = vmatprep.subr.mxu0 0.0
        %345 = vmatpush1.xpose.msra.mxu0 %v316
        %346 = vmatprep.subr.mxu0 0.0
        %347 = vmatpush1.xpose.msra.mxu0 %v315
        %348 = vmatprep.subr.mxu0 0.0
        %349 = vmatpush1.xpose.msra.mxu0 %v314
        %350 = vmatprep.subr.mxu0 0.0
        %351 = vmatpush1.xpose.msra.mxu0 %v313
        %352 = vmatprep.subr.mxu0 0.0
        %353 = vmatpush1.xpose.msra.mxu0 %v312
        %354 = vmatprep.subr.mxu0 0.0
        %355 = vmatpush1.xpose.msra.mxu0 %v311
        %356 = vmatprep.subr.mxu0 0.0
        %357 = vmatpush1.xpose.msra.mxu0 %v310
        %358 = vmatprep.subr.mxu0 0.0
        %359 = vmatpush2.xpose.msra.mxu0 0.0
        %360 = vmatprep.subr.mxu0 0.0
        %361 = vmatpush2.xpose.msra.mxu0 0.0
        %362 = vmatprep.subr.mxu0 0.0
        %363 = vmatpush2.xpose.msra.mxu0 0.0
        %364 = vmatprep.subr.mxu0 0.0
        %365 = vmatpush2.xpose.msra.mxu0 0.0
        %366 = vmatprep.subr.mxu0 0.0
        %367 = vmatpush2.xpose.msra.mxu0 0.0
        %368 = vmatprep.subr.mxu0 0.0
        %369 = vmatpush2.xpose.msra.mxu0 0.0
        %370 = vmatprep.subr.mxu0 0.0
        %371 = vmatpush2.xpose.msra.mxu0 0.0
        %372 = vmatprep.subr.mxu0 0.0
        %373 = vmatpush2.xpose.msra.mxu0 0.0
        %374 = vmatprep.subr.mxu0 0.0
        %375 = vmatpush2.xpose.msra.mxu0 0.0
        %376 = vmatprep.subr.mxu0 0.0
        %377 = vmatpush2.xpose.msra.mxu0 0.0
        %378 = vmatprep.subr.mxu0 0.0
        %379 = vmatpush2.xpose.msra.mxu0 0.0
        %380 = vmatprep.subr.mxu0 0.0
        %381 = vmatpush2.xpose.msra.mxu0 0.0
        %382 = vmatprep.subr.mxu0 0.0
        %383 = vmatpush2.xpose.msra.mxu0 0.0
        %384 = vmatprep.subr.mxu0 0.0
        %385 = vmatpush2.xpose.msra.mxu0 0.0
        %386 = vmatprep.subr.mxu0 0.0
        %387 = vmatpush2.xpose.msra.mxu0 0.0
        %388 = vmatprep.subr.mxu0 0.0
        %389 = vmatpush2.xpose.msra.mxu0 0.0
        %390 = vmatprep.mubr.f32.mxu0 0.0
        %391 = vmatmul.mubr.f32.gmra.mxu0 %v278
        %v392 = vpop.f32.mrf.mxu0
        %v393 = vadd.f32 0.0, %v392
        %v394 = vpop.f32.mrf.mxu0
        %395 = vmatprep.mubr.f32.mxu0 0.0
        %396 = vmatmul.mubr.f32.gmra.mxu0 %v279
        %v397 = vpop.f32.mrf.mxu0
        %v398 = vadd.f32 0.0, %v397
        %v399 = vpop.f32.mrf.mxu0
        %400 = vmatprep.mubr.f32.mxu0 0.0
        %401 = vmatmul.mubr.f32.gmra.mxu0 %v280
        %v402 = vpop.f32.mrf.mxu0
        %v403 = vadd.f32 0.0, %v402
        %v404 = vpop.f32.mrf.mxu0
        %405 = vmatprep.mubr.f32.mxu0 0.0
        %406 = vmatmul.mubr.f32.gmra.mxu0 %v281
        %v407 = vpop.f32.mrf.mxu0
        %v408 = vadd.f32 0.0, %v407
        %v409 = vpop.f32.mrf.mxu0
        %410 = vmatprep.mubr.f32.mxu0 0.0
        %411 = vmatmul.mubr.f32.gmra.mxu0 %v282
        %v412 = vpop.f32.mrf.mxu0
        %v413 = vadd.f32 0.0, %v412
        %v414 = vpop.f32.mrf.mxu0
        %415 = vmatprep.mubr.f32.mxu0 0.0
        %416 = vmatmul.mubr.f32.gmra.mxu0 %v283
        %v417 = vpop.f32.mrf.mxu0
        %v418 = vadd.f32 0.0, %v417
        %v419 = vpop.f32.mrf.mxu0
        %420 = vmatprep.mubr.f32.mxu0 0.0
        %421 = vmatmul.mubr.f32.gmra.mxu0 %v284
        %v422 = vpop.f32.mrf.mxu0
        %v423 = vadd.f32 0.0, %v422
        %v424 = vpop.f32.mrf.mxu0
        %425 = vmatprep.mubr.f32.mxu0 0.0
        %426 = vmatmul.mubr.f32.gmra.mxu0 %v285
        %v427 = vpop.f32.mrf.mxu0
        %v428 = vadd.f32 0.0, %v427
        %v429 = vpop.f32.mrf.mxu0
        %430 = vmatprep.mubr.f32.mxu0 0.0
        %431 = vmatmul.mubr.f32.gmra.mxu0 %v286
        %v432 = vpop.f32.mrf.mxu0
        %v433 = vadd.f32 0.0, %v432
        %v434 = vpop.f32.mrf.mxu0
        %435 = vmatprep.mubr.f32.mxu0 0.0
        %436 = vmatmul.mubr.f32.gmra.mxu0 %v287
        %v437 = vpop.f32.mrf.mxu0
        %v438 = vadd.f32 0.0, %v437
        %v439 = vpop.f32.mrf.mxu0
        %440 = vmatprep.mubr.f32.mxu0 0.0
        %441 = vmatmul.mubr.f32.gmra.mxu0 %v288
        %v442 = vpop.f32.mrf.mxu0
        %v443 = vadd.f32 0.0, %v442
        %v444 = vpop.f32.mrf.mxu0
        %445 = vmatprep.mubr.f32.mxu0 0.0
        %446 = vmatmul.mubr.f32.gmra.mxu0 %v289
        %v447 = vpop.f32.mrf.mxu0
        %v448 = vadd.f32 0.0, %v447
        %v449 = vpop.f32.mrf.mxu0
        %450 = vmatprep.mubr.f32.mxu0 0.0
        %451 = vmatmul.mubr.f32.gmra.mxu0 %v290
        %v452 = vpop.f32.mrf.mxu0
        %v453 = vadd.f32 0.0, %v452
        %v454 = vpop.f32.mrf.mxu0
        %455 = vmatprep.mubr.f32.mxu0 0.0
        %456 = vmatmul.mubr.f32.gmra.mxu0 %v291
        %v457 = vpop.f32.mrf.mxu0
        %v458 = vadd.f32 0.0, %v457
        %v459 = vpop.f32.mrf.mxu0
        %460 = vmatprep.mubr.f32.mxu0 0.0
        %461 = vmatmul.mubr.f32.gmra.mxu0 %v292
        %v462 = vpop.f32.mrf.mxu0
        %v463 = vadd.f32 0.0, %v462
        %v464 = vpop.f32.mrf.mxu0
        %465 = vmatprep.mubr.f32.mxu0 0.0
        %466 = vmatmul.mubr.f32.gmra.mxu0 %v293
        %v467 = vpop.f32.mrf.mxu0
        %v468 = vadd.f32 0.0, %v467
        %v469 = vpop.f32.mrf.mxu0
        %470 = vmatprep.mubr.f32.mxu0 0.0
        %471 = vmatmul.mubr.f32.gmra.mxu0 %v294
        %v472 = vpop.f32.mrf.mxu0
        %v473 = vadd.f32 0.0, %v472
        %v474 = vpop.f32.mrf.mxu0
        %475 = vmatprep.mubr.f32.mxu0 0.0
        %476 = vmatmul.mubr.f32.gmra.mxu0 %v295
        %v477 = vpop.f32.mrf.mxu0
        %v478 = vadd.f32 0.0, %v477
        %v479 = vpop.f32.mrf.mxu0
        %480 = vmatprep.mubr.f32.mxu0 0.0
        %481 = vmatmul.mubr.f32.gmra.mxu0 %v296
        %v482 = vpop.f32.mrf.mxu0
        %v483 = vadd.f32 0.0, %v482
        %v484 = vpop.f32.mrf.mxu0
        %485 = vmatprep.mubr.f32.mxu0 0.0
        %486 = vmatmul.mubr.f32.gmra.mxu0 %v297
        %v487 = vpop.f32.mrf.mxu0
        %v488 = vadd.f32 0.0, %v487
        %v489 = vpop.f32.mrf.mxu0
        %490 = vmatprep.mubr.f32.mxu0 0.0
        %491 = vmatmul.mubr.f32.gmra.mxu0 %v298
        %v492 = vpop.f32.mrf.mxu0
        %v493 = vadd.f32 0.0, %v492
        %v494 = vpop.f32.mrf.mxu0
        %495 = vmatprep.mubr.f32.mxu0 0.0
        %496 = vmatmul.mubr.f32.gmra.mxu0 %v299
        %v497 = vpop.f32.mrf.mxu0
        %v498 = vadd.f32 0.0, %v497
        %v499 = vpop.f32.mrf.mxu0
        %500 = vmatprep.mubr.f32.mxu0 0.0
        %501 = vmatmul.mubr.f32.gmra.mxu0 %v300
        %v502 = vpop.f32.mrf.mxu0
        %v503 = vadd.f32 0.0, %v502
        %v504 = vpop.f32.mrf.mxu0
        %505 = vmatprep.mubr.f32.mxu0 0.0
        %506 = vmatmul.mubr.f32.gmra.mxu0 %v301
        %v507 = vpop.f32.mrf.mxu0
        %v508 = vadd.f32 0.0, %v507
        %v509 = vpop.f32.mrf.mxu0
        %510 = vmatprep.mubr.f32.mxu0 0.0
        %511 = vmatmul.mubr.f32.gmra.mxu0 %v302
        %v512 = vpop.f32.mrf.mxu0
        %v513 = vadd.f32 0.0, %v512
        %v514 = vpop.f32.mrf.mxu0
        %515 = vmatprep.mubr.f32.mxu0 0.0
        %516 = vmatmul.mubr.f32.gmra.mxu0 %v303
        %v517 = vpop.f32.mrf.mxu0
        %v518 = vadd.f32 0.0, %v517
        %v519 = vpop.f32.mrf.mxu0
        %520 = vmatprep.mubr.f32.mxu0 0.0
        %521 = vmatmul.mubr.f32.gmra.mxu0 %v304
        %v522 = vpop.f32.mrf.mxu0
        %v523 = vadd.f32 0.0, %v522
        %v524 = vpop.f32.mrf.mxu0
        %525 = vmatprep.mubr.f32.mxu0 0.0
        %526 = vmatmul.mubr.f32.gmra.mxu0 %v305
        %v527 = vpop.f32.mrf.mxu0
        %v528 = vadd.f32 0.0, %v527
        %v529 = vpop.f32.mrf.mxu0
        %530 = vmatprep.mubr.f32.mxu0 0.0
        %531 = vmatmul.mubr.f32.gmra.mxu0 %v306
        %v532 = vpop.f32.mrf.mxu0
        %v533 = vadd.f32 0.0, %v532
        %v534 = vpop.f32.mrf.mxu0
        %535 = vmatprep.mubr.f32.mxu0 0.0
        %536 = vmatmul.mubr.f32.gmra.mxu0 %v307
        %v537 = vpop.f32.mrf.mxu0
        %v538 = vadd.f32 0.0, %v537
        %v539 = vpop.f32.mrf.mxu0
        %540 = vmatprep.mubr.f32.mxu0 0.0
        %541 = vmatmul.mubr.f32.gmra.mxu0 %v308
        %v542 = vpop.f32.mrf.mxu0
        %v543 = vadd.f32 0.0, %v542
        %v544 = vpop.f32.mrf.mxu0
        %545 = vmatprep.mubr.f32.mxu0 0.0
        %546 = vmatmul.mubr.f32.gmra.mxu0 %v309
        %v547 = vpop.f32.mrf.mxu0
        %v548 = vadd.f32 0.0, %v547
        %v549 = vpop.f32.mrf.mxu0
        %550 = vdwg.mxu0
        %v551 = vsub.f32 %v393, 0.5
        %v552 = vsub.f32 %v398, 0.5
        %v553 = vsub.f32 %v403, 0.5
        %v554 = vsub.f32 %v408, 0.5
        %v555 = vsub.f32 %v413, 0.5
        %v556 = vsub.f32 %v418, 0.5
        %v557 = vsub.f32 %v423, 0.5
        %v558 = vsub.f32 %v428, 0.5
        %v559 = vsub.f32 %v433, 0.5
        %v560 = vsub.f32 %v438, 0.5
        %v561 = vsub.f32 %v443, 0.5
        %v562 = vsub.f32 %v448, 0.5
        %v563 = vsub.f32 %v453, 0.5
        %v564 = vsub.f32 %v458, 0.5
        %v565 = vsub.f32 %v463, 0.5
        %v566 = vsub.f32 %v468, 0.5
        %v567 = vsub.f32 %v473, 0.5
        %v568 = vsub.f32 %v478, 0.5
        %v569 = vsub.f32 %v483, 0.5
        %v570 = vsub.f32 %v488, 0.5
        %v571 = vsub.f32 %v493, 0.5
        %v572 = vsub.f32 %v498, 0.5
        %v573 = vsub.f32 %v503, 0.5
        %v574 = vsub.f32 %v508, 0.5
        %v575 = vsub.f32 %v513, 0.5
        %v576 = vsub.f32 %v518, 0.5
        %v577 = vsub.f32 %v523, 0.5
        %v578 = vsub.f32 %v528, 0.5
        %v579 = vsub.f32 %v533, 0.5
        %v580 = vsub.f32 %v538, 0.5
        %v581 = vsub.f32 %v543, 0.5
        %v582 = vsub.f32 %v548, 0.5
        %vm583 = vcmp.ge.f32.partialorder %v551, 0.0
        %vm584 = vcmp.ge.f32.partialorder %v552, 0.0
        %vm585 = vcmp.ge.f32.partialorder %v553, 0.0
        %vm586 = vcmp.ge.f32.partialorder %v554, 0.0
        %vm587 = vcmp.ge.f32.partialorder %v555, 0.0
        %vm588 = vcmp.ge.f32.partialorder %v556, 0.0
        %vm589 = vcmp.ge.f32.partialorder %v557, 0.0
        %vm590 = vcmp.ge.f32.partialorder %v558, 0.0
        %vm591 = vcmp.ge.f32.partialorder %v559, 0.0
        %vm592 = vcmp.ge.f32.partialorder %v560, 0.0
        %vm593 = vcmp.ge.f32.partialorder %v561, 0.0
        %vm594 = vcmp.ge.f32.partialorder %v562, 0.0
        %vm595 = vcmp.ge.f32.partialorder %v563, 0.0
        %vm596 = vcmp.ge.f32.partialorder %v564, 0.0
        %vm597 = vcmp.ge.f32.partialorder %v565, 0.0
        %vm598 = vcmp.ge.f32.partialorder %v566, 0.0
        %vm599 = vcmp.ge.f32.partialorder %v567, 0.0
        %vm600 = vcmp.ge.f32.partialorder %v568, 0.0
        %vm601 = vcmp.ge.f32.partialorder %v569, 0.0
        %vm602 = vcmp.ge.f32.partialorder %v570, 0.0
        %vm603 = vcmp.ge.f32.partialorder %v571, 0.0
        %vm604 = vcmp.ge.f32.partialorder %v572, 0.0
        %vm605 = vcmp.ge.f32.partialorder %v573, 0.0
        %vm606 = vcmp.ge.f32.partialorder %v574, 0.0
        %vm607 = vcmp.ge.f32.partialorder %v575, 0.0
        %vm608 = vcmp.ge.f32.partialorder %v576, 0.0
        %vm609 = vcmp.ge.f32.partialorder %v577, 0.0
        %vm610 = vcmp.ge.f32.partialorder %v578, 0.0
        %vm611 = vcmp.ge.f32.partialorder %v579, 0.0
        %vm612 = vcmp.ge.f32.partialorder %v580, 0.0
        %vm613 = vcmp.ge.f32.partialorder %v581, 0.0
        %vm614 = vcmp.ge.f32.partialorder %v582, 0.0
        %v615 = vsel %vm583, 1, 0
        %v616 = vsel %vm584, 1, 0
        %v617 = vsel %vm585, 1, 0
        %v618 = vsel %vm586, 1, 0
        %v619 = vsel %vm587, 1, 0
        %v620 = vsel %vm588, 1, 0
        %v621 = vsel %vm589, 1, 0
        %v622 = vsel %vm590, 1, 0
        %v623 = vsel %vm591, 1, 0
        %v624 = vsel %vm592, 1, 0
        %v625 = vsel %vm593, 1, 0
        %v626 = vsel %vm594, 1, 0
        %v627 = vsel %vm595, 1, 0
        %v628 = vsel %vm596, 1, 0
        %v629 = vsel %vm597, 1, 0
        %v630 = vsel %vm598, 1, 0
        %v631 = vsel %vm599, 1, 0
        %v632 = vsel %vm600, 1, 0
        %v633 = vsel %vm601, 1, 0
        %v634 = vsel %vm602, 1, 0
        %v635 = vsel %vm603, 1, 0
        %v636 = vsel %vm604, 1, 0
        %v637 = vsel %vm605, 1, 0
        %v638 = vsel %vm606, 1, 0
        %v639 = vsel %vm607, 1, 0
        %v640 = vsel %vm608, 1, 0
        %v641 = vsel %vm609, 1, 0
        %v642 = vsel %vm610, 1, 0
        %v643 = vsel %vm611, 1, 0
        %v644 = vsel %vm612, 1, 0
        %v645 = vsel %vm613, 1, 0
        %v646 = vsel %vm614, 1, 0
        %v647 = vcvt.s32.f32 %v615
        %v648 = vcvt.s32.f32 %v616
        %v649 = vcvt.s32.f32 %v617
        %v650 = vcvt.s32.f32 %v618
        %v651 = vcvt.s32.f32 %v619
        %v652 = vcvt.s32.f32 %v620
        %v653 = vcvt.s32.f32 %v621
        %v654 = vcvt.s32.f32 %v622
        %v655 = vcvt.s32.f32 %v623
        %v656 = vcvt.s32.f32 %v624
        %v657 = vcvt.s32.f32 %v625
        %v658 = vcvt.s32.f32 %v626
        %v659 = vcvt.s32.f32 %v627
        %v660 = vcvt.s32.f32 %v628
        %v661 = vcvt.s32.f32 %v629
        %v662 = vcvt.s32.f32 %v630
        %v663 = vcvt.s32.f32 %v631
        %v664 = vcvt.s32.f32 %v632
        %v665 = vcvt.s32.f32 %v633
        %v666 = vcvt.s32.f32 %v634
        %v667 = vcvt.s32.f32 %v635
        %v668 = vcvt.s32.f32 %v636
        %v669 = vcvt.s32.f32 %v637
        %v670 = vcvt.s32.f32 %v638
        %v671 = vcvt.s32.f32 %v639
        %v672 = vcvt.s32.f32 %v640
        %v673 = vcvt.s32.f32 %v641
        %v674 = vcvt.s32.f32 %v642
        %v675 = vcvt.s32.f32 %v643
        %v676 = vcvt.s32.f32 %v644
        %v677 = vcvt.s32.f32 %v645
        %v678 = vcvt.s32.f32 %v646
        %679 = vst [vmem:[%s246] sm:$0xff] %v647
        %680 = vst [vmem:[%s246 + $0x8] sm:$0xff] %v648
        %681 = vst [vmem:[%s246 + $0x10] sm:$0xff] %v649
        %682 = vst [vmem:[%s246 + $0x18] sm:$0xff] %v650
        %683 = vst [vmem:[%s246 + $0x20] sm:$0xff] %v651
        %684 = vst [vmem:[%s246 + $0x28] sm:$0xff] %v652
        %685 = vst [vmem:[%s246 + $0x30] sm:$0xff] %v653
        %686 = vst [vmem:[%s246 + $0x38] sm:$0xff] %v654
        %687 = vst [vmem:[%s246 + $0x40] sm:$0xff] %v655
        %688 = vst [vmem:[%s246 + $0x48] sm:$0xff] %v656
        %689 = vst [vmem:[%s246 + $0x50] sm:$0xff] %v657
        %690 = vst [vmem:[%s246 + $0x58] sm:$0xff] %v658
        %691 = vst [vmem:[%s246 + $0x60] sm:$0xff] %v659
        %692 = vst [vmem:[%s246 + $0x68] sm:$0xff] %v660
        %693 = vst [vmem:[%s246 + $0x70] sm:$0xff] %v661
        %694 = vst [vmem:[%s246 + $0x78] sm:$0xff] %v662
        %695 = vst [vmem:[%s246 + $0x80] sm:$0xff] %v663
        %696 = vst [vmem:[%s246 + $0x88] sm:$0xff] %v664
        %697 = vst [vmem:[%s246 + $0x90] sm:$0xff] %v665
        %698 = vst [vmem:[%s246 + $0x98] sm:$0xff] %v666
        %699 = vst [vmem:[%s246 + $0xa0] sm:$0xff] %v667
        %700 = vst [vmem:[%s246 + $0xa8] sm:$0xff] %v668
        %701 = vst [vmem:[%s246 + $0xb0] sm:$0xff] %v669
        %702 = vst [vmem:[%s246 + $0xb8] sm:$0xff] %v670
        %703 = vst [vmem:[%s246 + $0xc0] sm:$0xff] %v671
        %704 = vst [vmem:[%s246 + $0xc8] sm:$0xff] %v672
        %705 = vst [vmem:[%s246 + $0xd0] sm:$0xff] %v673
        %706 = vst [vmem:[%s246 + $0xd8] sm:$0xff] %v674
        %707 = vst [vmem:[%s246 + $0xe0] sm:$0xff] %v675
        %708 = vst [vmem:[%s246 + $0xe8] sm:$0xff] %v676
        %709 = vst [vmem:[%s246 + $0xf0] sm:$0xff] %v677
        %710 = vst [vmem:[%s246 + $0xf8] sm:$0xff] %v678
        %v711 = vld [vmem:[%s253] sm:$0xff]
        %v712 = vld [vmem:[%s253 + $0x8] sm:$0xff]
        %v713 = vld [vmem:[%s253 + $0x10] sm:$0xff]
        %v714 = vld [vmem:[%s253 + $0x18] sm:$0xff]
        %v715 = vld [vmem:[%s253 + $0x20] sm:$0xff]
        %v716 = vld [vmem:[%s253 + $0x28] sm:$0xff]
        %v717 = vld [vmem:[%s253 + $0x30] sm:$0xff]
        %v718 = vld [vmem:[%s253 + $0x38] sm:$0xff]
        %v719 = vld [vmem:[%s253 + $0x40] sm:$0xff]
        %v720 = vld [vmem:[%s253 + $0x48] sm:$0xff]
        %v721 = vld [vmem:[%s253 + $0x50] sm:$0xff]
        %v722 = vld [vmem:[%s253 + $0x58] sm:$0xff]
        %v723 = vld [vmem:[%s253 + $0x60] sm:$0xff]
        %v724 = vld [vmem:[%s253 + $0x68] sm:$0xff]
        %v725 = vld [vmem:[%s253 + $0x70] sm:$0xff]
        %v726 = vld [vmem:[%s253 + $0x78] sm:$0xff]
        %727 = vxpose.xlu0.b32.start [1/16] %v647, 128
        %728 = vxpose.xlu0.b32.cont [2/16] %v648, 128
        %729 = vxpose.xlu0.b32.cont [3/16] %v649, 128
        %730 = vxpose.xlu0.b32.cont [4/16] %v650, 128
        %731 = vxpose.xlu0.b32.cont [5/16] %v651, 128
        %732 = vxpose.xlu0.b32.cont [6/16] %v652, 128
        %733 = vxpose.xlu0.b32.cont [7/16] %v653, 128
        %734 = vxpose.xlu0.b32.cont [8/16] %v654, 128
        %735 = vxpose.xlu0.b32.cont [9/16] %v655, 128
        %736 = vxpose.xlu0.b32.cont [10/16] %v656, 128
        %737 = vxpose.xlu0.b32.cont [11/16] %v657, 128
        %738 = vxpose.xlu0.b32.cont [12/16] %v658, 128
        %739 = vxpose.xlu0.b32.cont [13/16] %v659, 128
        %740 = vxpose.xlu0.b32.cont [14/16] %v660, 128
        %741 = vxpose.xlu0.b32.cont [15/16] %v661, 128
        %742 = vxpose.xlu0.b32.end [16/16] %v662, 128
        %v743 = vpop.trf.xlu0
        %v744 = vpop.trf.xlu0
        %v745 = vpop.trf.xlu0
        %v746 = vpop.trf.xlu0
        %v747 = vpop.trf.xlu0
        %v748 = vpop.trf.xlu0
        %v749 = vpop.trf.xlu0
        %v750 = vpop.trf.xlu0
        %v751 = vpop.trf.xlu0
        %v752 = vpop.trf.xlu0
        %v753 = vpop.trf.xlu0
        %v754 = vpop.trf.xlu0
        %v755 = vpop.trf.xlu0
        %v756 = vpop.trf.xlu0
        %v757 = vpop.trf.xlu0
        %v758 = vpop.trf.xlu0
        %759 = vxpose.xlu0.b32.start [1/16] %v663, 128
        %760 = vxpose.xlu0.b32.cont [2/16] %v664, 128
        %761 = vxpose.xlu0.b32.cont [3/16] %v665, 128
        %762 = vxpose.xlu0.b32.cont [4/16] %v666, 128
        %763 = vxpose.xlu0.b32.cont [5/16] %v667, 128
        %764 = vxpose.xlu0.b32.cont [6/16] %v668, 128
        %765 = vxpose.xlu0.b32.cont [7/16] %v669, 128
        %766 = vxpose.xlu0.b32.cont [8/16] %v670, 128
        %767 = vxpose.xlu0.b32.cont [9/16] %v671, 128
        %768 = vxpose.xlu0.b32.cont [10/16] %v672, 128
        %769 = vxpose.xlu0.b32.cont [11/16] %v673, 128
        %770 = vxpose.xlu0.b32.cont [12/16] %v674, 128
        %771 = vxpose.xlu0.b32.cont [13/16] %v675, 128
        %772 = vxpose.xlu0.b32.cont [14/16] %v676, 128
        %773 = vxpose.xlu0.b32.cont [15/16] %v677, 128
        %774 = vxpose.xlu0.b32.end [16/16] %v678, 128
        %v775 = vpop.trf.xlu0
        %v776 = vpop.trf.xlu0
        %v777 = vpop.trf.xlu0
        %v778 = vpop.trf.xlu0
        %v779 = vpop.trf.xlu0
        %v780 = vpop.trf.xlu0
        %v781 = vpop.trf.xlu0
        %v782 = vpop.trf.xlu0
        %v783 = vpop.trf.xlu0
        %v784 = vpop.trf.xlu0
        %v785 = vpop.trf.xlu0
        %v786 = vpop.trf.xlu0
        %v787 = vpop.trf.xlu0
        %v788 = vpop.trf.xlu0
        %v789 = vpop.trf.xlu0
        %v790 = vpop.trf.xlu0
        %791 = vmatprep.subr.mxu0 0.0
        %792 = vmatpush1.msra.mxu0 %v293
        %793 = vmatprep.subr.mxu0 0.0
        %794 = vmatpush1.msra.mxu0 %v292
        %795 = vmatprep.subr.mxu0 0.0
        %796 = vmatpush1.msra.mxu0 %v291
        %797 = vmatprep.subr.mxu0 0.0
        %798 = vmatpush1.msra.mxu0 %v290
        %799 = vmatprep.subr.mxu0 0.0
        %800 = vmatpush1.msra.mxu0 %v289
        %801 = vmatprep.subr.mxu0 0.0
        %802 = vmatpush1.msra.mxu0 %v288
        %803 = vmatprep.subr.mxu0 0.0
        %804 = vmatpush1.msra.mxu0 %v287
        %805 = vmatprep.subr.mxu0 0.0
        %806 = vmatpush1.msra.mxu0 %v286
        %807 = vmatprep.subr.mxu0 0.0
        %808 = vmatpush1.msra.mxu0 %v285
        %809 = vmatprep.subr.mxu0 0.0
        %810 = vmatpush1.msra.mxu0 %v284
        %811 = vmatprep.subr.mxu0 0.0
        %812 = vmatpush1.msra.mxu0 %v283
        %813 = vmatprep.subr.mxu0 0.0
        %814 = vmatpush1.msra.mxu0 %v282
        %815 = vmatprep.subr.mxu0 0.0
        %816 = vmatpush1.msra.mxu0 %v281
        %817 = vmatprep.subr.mxu0 0.0
        %818 = vmatpush1.msra.mxu0 %v280
        %819 = vmatprep.subr.mxu0 0.0
        %820 = vmatpush1.msra.mxu0 %v279
        %821 = vmatprep.subr.mxu0 0.0
        %822 = vmatpush1.msra.mxu0 %v278
        %823 = vmatprep.subr.mxu0 0.0
        %824 = vmatpush2.msra.mxu0 %v309
        %825 = vmatprep.subr.mxu0 0.0
        %826 = vmatpush2.msra.mxu0 %v308
        %827 = vmatprep.subr.mxu0 0.0
        %828 = vmatpush2.msra.mxu0 %v307
        %829 = vmatprep.subr.mxu0 0.0
        %830 = vmatpush2.msra.mxu0 %v306
        %831 = vmatprep.subr.mxu0 0.0
        %832 = vmatpush2.msra.mxu0 %v305
        %833 = vmatprep.subr.mxu0 0.0
        %834 = vmatpush2.msra.mxu0 %v304
        %835 = vmatprep.subr.mxu0 0.0
        %836 = vmatpush2.msra.mxu0 %v303
        %837 = vmatprep.subr.mxu0 0.0
        %838 = vmatpush2.msra.mxu0 %v302
        %839 = vmatprep.subr.mxu0 0.0
        %840 = vmatpush2.msra.mxu0 %v301
        %841 = vmatprep.subr.mxu0 0.0
        %842 = vmatpush2.msra.mxu0 %v300
        %843 = vmatprep.subr.mxu0 0.0
        %844 = vmatpush2.msra.mxu0 %v299
        %845 = vmatprep.subr.mxu0 0.0
        %846 = vmatpush2.msra.mxu0 %v298
        %847 = vmatprep.subr.mxu0 0.0
        %848 = vmatpush2.msra.mxu0 %v297
        %849 = vmatprep.subr.mxu0 0.0
        %850 = vmatpush2.msra.mxu0 %v296
        %851 = vmatprep.subr.mxu0 0.0
        %852 = vmatpush2.msra.mxu0 %v295
        %853 = vmatprep.subr.mxu0 0.0
        %854 = vmatpush2.msra.mxu0 %v294
        %855 = vmatprep.mubr.f32.mxu0 %v775
        %856 = vmatmul.mubr.f32.gmra.mxu0 %v743
        %v857 = vpop.f32.mrf.mxu0
        %v858 = vadd.f32 0.0, %v857
        %v859 = vpop.f32.mrf.mxu0
        %860 = vmatprep.mubr.f32.mxu0 %v776
        %861 = vmatmul.mubr.f32.gmra.mxu0 %v744
        %v862 = vpop.f32.mrf.mxu0
        %v863 = vadd.f32 0.0, %v862
        %v864 = vpop.f32.mrf.mxu0
        %865 = vmatprep.mubr.f32.mxu0 %v777
        %866 = vmatmul.mubr.f32.gmra.mxu0 %v745
        %v867 = vpop.f32.mrf.mxu0
        %v868 = vadd.f32 0.0, %v867
        %v869 = vpop.f32.mrf.mxu0
        %870 = vmatprep.mubr.f32.mxu0 %v778
        %871 = vmatmul.mubr.f32.gmra.mxu0 %v746
        %v872 = vpop.f32.mrf.mxu0
        %v873 = vadd.f32 0.0, %v872
        %v874 = vpop.f32.mrf.mxu0
        %875 = vmatprep.mubr.f32.mxu0 %v779
        %876 = vmatmul.mubr.f32.gmra.mxu0 %v747
        %v877 = vpop.f32.mrf.mxu0
        %v878 = vadd.f32 0.0, %v877
        %v879 = vpop.f32.mrf.mxu0
        %880 = vmatprep.mubr.f32.mxu0 %v780
        %881 = vmatmul.mubr.f32.gmra.mxu0 %v748
        %v882 = vpop.f32.mrf.mxu0
        %v883 = vadd.f32 0.0, %v882
        %v884 = vpop.f32.mrf.mxu0
        %885 = vmatprep.mubr.f32.mxu0 %v781
        %886 = vmatmul.mubr.f32.gmra.mxu0 %v749
        %v887 = vpop.f32.mrf.mxu0
        %v888 = vadd.f32 0.0, %v887
        %v889 = vpop.f32.mrf.mxu0
        %890 = vmatprep.mubr.f32.mxu0 %v782
        %891 = vmatmul.mubr.f32.gmra.mxu0 %v750
        %v892 = vpop.f32.mrf.mxu0
        %v893 = vadd.f32 0.0, %v892
        %v894 = vpop.f32.mrf.mxu0
        %895 = vmatprep.mubr.f32.mxu0 %v783
        %896 = vmatmul.mubr.f32.gmra.mxu0 %v751
        %v897 = vpop.f32.mrf.mxu0
        %v898 = vadd.f32 0.0, %v897
        %v899 = vpop.f32.mrf.mxu0
        %900 = vmatprep.mubr.f32.mxu0 %v784
        %901 = vmatmul.mubr.f32.gmra.mxu0 %v752
        %v902 = vpop.f32.mrf.mxu0
        %v903 = vadd.f32 0.0, %v902
        %v904 = vpop.f32.mrf.mxu0
        %905 = vmatprep.mubr.f32.mxu0 %v785
        %906 = vmatmul.mubr.f32.gmra.mxu0 %v753
        %v907 = vpop.f32.mrf.mxu0
        %v908 = vadd.f32 0.0, %v907
        %v909 = vpop.f32.mrf.mxu0
        %910 = vmatprep.mubr.f32.mxu0 %v786
        %911 = vmatmul.mubr.f32.gmra.mxu0 %v754
        %v912 = vpop.f32.mrf.mxu0
        %v913 = vadd.f32 0.0, %v912
        %v914 = vpop.f32.mrf.mxu0
        %915 = vmatprep.mubr.f32.mxu0 %v787
        %916 = vmatmul.mubr.f32.gmra.mxu0 %v755
        %v917 = vpop.f32.mrf.mxu0
        %v918 = vadd.f32 0.0, %v917
        %v919 = vpop.f32.mrf.mxu0
        %920 = vmatprep.mubr.f32.mxu0 %v788
        %921 = vmatmul.mubr.f32.gmra.mxu0 %v756
        %v922 = vpop.f32.mrf.mxu0
        %v923 = vadd.f32 0.0, %v922
        %v924 = vpop.f32.mrf.mxu0
        %925 = vmatprep.mubr.f32.mxu0 %v789
        %926 = vmatmul.mubr.f32.gmra.mxu0 %v757
        %v927 = vpop.f32.mrf.mxu0
        %v928 = vadd.f32 0.0, %v927
        %v929 = vpop.f32.mrf.mxu0
        %930 = vmatprep.mubr.f32.mxu0 %v790
        %931 = vmatmul.mubr.f32.gmra.mxu0 %v758
        %v932 = vpop.f32.mrf.mxu0
        %v933 = vadd.f32 0.0, %v932
        %v934 = vpop.f32.mrf.mxu0
        %935 = vdwg.mxu0
        %v936 = vadd.f32 %v711, %v858
        %v937 = vadd.f32 %v712, %v863
        %v938 = vadd.f32 %v713, %v868
        %v939 = vadd.f32 %v714, %v873
        %v940 = vadd.f32 %v715, %v878
        %v941 = vadd.f32 %v716, %v883
        %v942 = vadd.f32 %v717, %v888
        %v943 = vadd.f32 %v718, %v893
        %v944 = vadd.f32 %v719, %v898
        %v945 = vadd.f32 %v720, %v903
        %v946 = vadd.f32 %v721, %v908
        %v947 = vadd.f32 %v722, %v913
        %v948 = vadd.f32 %v723, %v918
        %v949 = vadd.f32 %v724, %v923
        %v950 = vadd.f32 %v725, %v928
        %v951 = vadd.f32 %v726, %v933
        %952 = vst [vmem:[%s253] sm:$0xff] %v936
        %953 = vst [vmem:[%s253 + $0x8] sm:$0xff] %v937
        %954 = vst [vmem:[%s253 + $0x10] sm:$0xff] %v938
        %955 = vst [vmem:[%s253 + $0x18] sm:$0xff] %v939
        %956 = vst [vmem:[%s253 + $0x20] sm:$0xff] %v940
        %957 = vst [vmem:[%s253 + $0x28] sm:$0xff] %v941
        %958 = vst [vmem:[%s253 + $0x30] sm:$0xff] %v942
        %959 = vst [vmem:[%s253 + $0x38] sm:$0xff] %v943
        %960 = vst [vmem:[%s253 + $0x40] sm:$0xff] %v944
        %961 = vst [vmem:[%s253 + $0x48] sm:$0xff] %v945
        %962 = vst [vmem:[%s253 + $0x50] sm:$0xff] %v946
        %963 = vst [vmem:[%s253 + $0x58] sm:$0xff] %v947
        %964 = vst [vmem:[%s253 + $0x60] sm:$0xff] %v948
        %965 = vst [vmem:[%s253 + $0x68] sm:$0xff] %v949
        %966 = vst [vmem:[%s253 + $0x70] sm:$0xff] %v950
        %967 = vst [vmem:[%s253 + $0x78] sm:$0xff] %v951
        %s968 = sand.u32 %s101, 1
        %s969 = scalar_lea.sflag [#allocation4], %s968
        %s970 = sand.u32 %s101, 1
        %s971 = smul.addr %s970, 256
        %s972 = scalar_lea.vmem [#allocation7], %s971
        %s973 = sand.u32 %s127, 1
        %s974 = scalar_lea.sflag [#allocation9], %s973
        %s975 = sand.u32 %s127, 1
        %s976 = smul.addr %s975, 128
        %s977 = scalar_lea.vmem [#allocation8], %s976
        // Predicated region
        $region41: #{tpu_custom_call.1} parent=27 // pred_check
          %p978 = pneg %p111
        $region42: #{tpu_custom_call.1} parent=27 // pred_check_branch
          %980 = sbr.rel (%p978) target = $region44
        $region43: #{tpu_custom_call.1} parent=27 // pred_region
          %s981 = smul.u32 32, %s32
          %s983 = ssub.s32 4096, 4096
          %984 = vsyncadd %s969, %s983
          %s985 = smul.addr %s981, 2
          %s986 = sadd.s32 %s31, %s985
          %s987 = smul.addr %s986, 128
          %s988 = scalar_lea.hbm %s2, %s987
          %s989 = sshll.u32 %s972, 4
          %s990 = int_to_ptr.vmem [resolvable:$true] %s989
          %995 = dma.vmem_to_hbm [thread:$0]  %s990, 4096, %s988, %s969, 128, 256, 8
        $region44: #{tpu_custom_call.1} parent=27 // pred_fallthru
          _
        // Predicated region
        $region45: #{tpu_custom_call.1} parent=27 // pred_check
          %p996 = pneg %p137
        $region46: #{tpu_custom_call.1} parent=27 // pred_check_branch
          %998 = sbr.rel (%p996) target = $region48
        $region47: #{tpu_custom_call.1} parent=27 // pred_region
          %s999 = smul.u32 16, %s31
          %s1001 = ssub.s32 2048, 2048
          %1002 = vsyncadd %s974, %s1001
          %s1003 = smul.addr %s999, 128
          %s1004 = scalar_lea.hbm %s3, %s1003
          %s1005 = sshll.u32 %s977, 4
          %s1006 = int_to_ptr.vmem [resolvable:$true] %s1005
          %1011 = dma.vmem_to_hbm [thread:$0]  %s1006, 2048, %s1004, %s974, 128, 128, 8
        $region48: #{tpu_custom_call.1} parent=27 // pred_fallthru
          _
      $region28: #{tpu_custom_call.1} parent=5 // pred_fallthru
        _
      %p1012 = scmp.le.s32.totalorder 2, %s22
      // Predicated region
      $region49: #{tpu_custom_call.1} parent=5 // pred_check
        %p1013 = pneg %p1012
      $region50: #{tpu_custom_call.1} parent=5 // pred_check_branch
        %1015 = sbr.rel (%p1013) target = $region52
      $region51: #{tpu_custom_call.1} parent=5 // pred_region
        %s1016 = ssub.s32 %s22, 2
        // Predicated region
        $region53: #{tpu_custom_call.1} parent=51 // pred_check
          %p1017 = pneg %p117
        $region54: #{tpu_custom_call.1} parent=51 // pred_check_branch
          %1019 = sbr.rel (%p1017) target = $region56
        $region55: #{tpu_custom_call.1} parent=51 // pred_region
          %s1020 = sand.u32 %s102, 1
          %s1021 = scalar_lea.sflag [#allocation4], %s1020
          %s1022 = sand.u32 %s102, 1
          %s1023 = smul.addr %s1022, 256
          %s1024 = scalar_lea.vmem [#allocation7], %s1023
          %1025 = dma.done %s1021, 4096
        $region56: #{tpu_custom_call.1} parent=51 // pred_fallthru
          _
        // Predicated region
        $region57: #{tpu_custom_call.1} parent=51 // pred_check
          %p1026 = pneg %p143
        $region58: #{tpu_custom_call.1} parent=51 // pred_check_branch
          %1028 = sbr.rel (%p1026) target = $region60
        $region59: #{tpu_custom_call.1} parent=51 // pred_region
          %s1029 = sand.u32 %s128, 1
          %s1030 = scalar_lea.sflag [#allocation9], %s1029
          %s1031 = sand.u32 %s128, 1
          %s1032 = smul.addr %s1031, 128
          %s1033 = scalar_lea.vmem [#allocation8], %s1032
          %1034 = dma.done %s1030, 2048
        $region60: #{tpu_custom_call.1} parent=51 // pred_fallthru
          _
      $region52: #{tpu_custom_call.1} parent=5 // pred_fallthru
        _
    $region6: #{tpu_custom_call.1} parent=1 // loop_footer
      %s26 = sadd.s32 1, %s22
    $region7: #{tpu_custom_call.1} parent=1 // loop_footer_branch
      %21 = sbr.rel target = $region3
    $region8: #{tpu_custom_call.1} parent=1 // loop_exit
      _
    %1035 = vsyncpa [#allocation3], 1
    %s1036 = scalar_lea.sflag [#allocation3], 1
    %1037 = vsyncpa %s1036, 1
    %1038 = vsyncpa [#allocation6], 1
    %s1039 = scalar_lea.sflag [#allocation6], 1
    %1040 = vsyncpa %s1039, 1
    %1041 = vsyncpa [#allocation4], 1
    %s1042 = scalar_lea.sflag [#allocation4], 1
    %1043 = vsyncpa %s1042, 1
    %1044 = vsyncpa [#allocation9], 1
    %s1045 = scalar_lea.sflag [#allocation9], 1
    %1046 = vsyncpa %s1045, 1

</llo_original>
